<compile_context>
chip_gen: v5e
topology: v5e:2x2
jax: 0.10.0
libtpu: 0.0.40
codegen_flags: <defaults>
</compile_context>

<pallas_src>
from functools import partial

import jax
import jax.numpy as jnp
from jax.experimental import pallas as pl
from jax.experimental.pallas import tpu as pltpu


def _forward_kernel(xf_ref, xb_ref, wf_ref, wb_ref, bf_ref, bb_ref,
                    w1f_ref, w1b_ref, b1_ref, w2_ref, b2_ref,
                    out_ref, h_ref, pooled_ref, acc_ref, *, K, TP, B):
    # xf_ref, xb_ref : (1, B*TP*K, K*C) bf16  im2col'd conv-input block (row = b*TP*K + p*K + k)
    # wf_ref, wb_ref : (K*C, F)         bf16  per-strand conv weights
    # bf_ref, bb_ref : (1, F)           f32
    # w1f_ref,w1b_ref: (TP*F, D)        bf16  streamed block of the first Linear (row = p*F + f)
    # b1_ref         : (1, D)           f32
    # w2_ref         : (1, D)           f32   second Linear (row vector)
    # b2_ref         : (1, 1)           f32
    # out_ref        : (B, 1)           f32   logits
    # h_ref          : (B*TP*K, F)      f32   scratch: conv + ReLU activations
    # pooled_ref     : (B*TP, F)        f32   scratch: max-pooled activations (row = b*TP + p)
    # acc_ref        : (B, D)           f32   scratch: dense-layer accumulator
    j = pl.program_id(0)

    @pl.when(j == 0)
    def _init():
        acc_ref[...] = jnp.zeros_like(acc_ref)

    # Two strands share all scratch; static 2-iteration loop (fixed, does not scale with size).
    for x_ref, w_ref, bias_ref, w1_ref in (
        (xf_ref, wf_ref, bf_ref, w1f_ref),
        (xb_ref, wb_ref, bb_ref, w1b_ref),
    ):
        # --- Conv1d('same') on the im2col'd block: ONE MXU matmul, contraction depth K*C ---
        x2d = x_ref[0]                                                      # (B*TP*K, K*C) bf16
        h = jnp.dot(x2d, w_ref[...], preferred_element_type=jnp.float32)    # (B*TP*K, F)  f32
        h_ref[...] = jnp.maximum(h + bias_ref[...], 0.0)                    # bias + ReLU (f32)

        # --- MaxPool1d(K): K strided sublane reads + elementwise max (single batched pass) ---
        pooled = h_ref[pl.ds(0, B * TP, stride=K), :]                       # rows -> b*TP + p
        for k in range(1, K):
            pooled = jnp.maximum(pooled, h_ref[pl.ds(k, B * TP, stride=K), :])
        pooled_ref[...] = pooled                                            # (B*TP, F) f32

        # --- Flatten to lane-major (B, TP*F) and fused first-Linear block matmul ---
        # Loop is bounded by TP (one block), not by P, so code size stays fixed at
        # production sequence lengths.
        flat = jnp.concatenate(
            [pooled_ref[pl.ds(p, B, stride=TP), :] for p in range(TP)], axis=1)
        acc_ref[...] += jnp.dot(flat.astype(jnp.bfloat16), w1_ref[...],
                                preferred_element_type=jnp.float32)          # (B, D) f32

    @pl.when(j == pl.num_programs(0) - 1)
    def _finalize():
        y1 = jnp.maximum(acc_ref[...] + b1_ref[...], 0.0)                   # dnn bias + ReLU
        # Dropout(p=0.33): identity at inference time.
        # Linear(D -> 1) as a VPU multiply-reduce (avoids an N=1 MXU pass).
        logit = jnp.sum(y1 * w2_ref[...], axis=-1, keepdims=True) + b2_ref[...]
        out_ref[...] = logit.astype(out_ref.dtype)                           # (B, 1)


def _choose_block(P, K, F, D, budget_bytes=4 << 20):
    """Largest divisor TP of P whose bf16 w1 block (TP*F, D) fits the per-block budget and
    keeps the conv block sublane-aligned (TP*K % 8 == 0); falls back to the smallest legal.
    Bigger blocks -> fewer grid steps (per-step overhead ~0.35 us) while staying VMEM-safe."""
    divisors = [t for t in range(1, P + 1) if P % t == 0 and ((t * K) % 8 == 0 or t == P)]
    fitting = [t for t in divisors if t * F * D * 2 <= budget_bytes]
    return max(fitting) if fitting else min(divisors)


def simple_cnn_forward(x, params, *, kernel_size, block_pooled=None):
    """x: (2, B, C, L) float32 — x[0]=forward strand, x[1]=backward strand (PyTorch NCL)."""
    K = kernel_size
    _, B, C, L = x.shape
    F = params["wf"].shape[0]
    D = params["w1"].shape[0]
    P = L // K                       # MaxPool1d(K) output length per strand
    assert P >= 1
    KC = K * C

    TP = block_pooled if block_pooled is not None else _choose_block(P, K, F, D)
    assert P % TP == 0, (P, TP)
    NP = P // TP

    pad_l = (K - 1) // 2             # PyTorch 'same' padding for even K: left=(K-1)//2
    pad_r = (K - 1) - pad_l          #                                    right=K-1-left

    def im2col_blocks(xi):
        # NCL -> NLC, 'same' pad, im2col (last idx = k*C + c), then arrange into per-grid-step
        # blocks: (NP, B*TP*K, K*C) with row = b*TP*K + t inside block j.
        xp = jnp.pad(jnp.transpose(xi, (0, 2, 1)), ((0, 0), (pad_l, pad_r), (0, 0)))
        cols = jnp.concatenate([xp[:, k:k + L, :] for k in range(K)], axis=-1)[:, :P * K, :]
        cols = cols.reshape(B, NP, TP * K, KC).transpose(1, 0, 2, 3).reshape(NP, B * TP * K, KC)
        return cols.astype(jnp.bfloat16)

    xf = im2col_blocks(x[0])
    xb = im2col_blocks(x[1])

    def conv_w(w):                   # (F, C, K) -> (K*C, F) matching im2col channel order
        return jnp.transpose(w, (2, 1, 0)).reshape(KC, F).astype(jnp.bfloat16)

    wf, wb = conv_w(params["wf"]), conv_w(params["wb"])
    bf = params["bf"].reshape(1, F).astype(jnp.float32)
    bb = params["bb"].reshape(1, F).astype(jnp.float32)

    # PyTorch Flatten of (B, F, 2P) is channel-major: flat index = f*2P + (strand*P + p).
    # Re-order to [strand][p*F + f, d] so contiguous row blocks of w1 match the lane-major
    # (B, TP*F) activation packing built inside the kernel.
    w1_r = params["w1"].T.reshape(F, 2, P, D).transpose(1, 2, 0, 3)      # [strand, p, f, d]
    w1f = w1_r[0].reshape(P * F, D).astype(jnp.bfloat16)
    w1b = w1_r[1].reshape(P * F, D).astype(jnp.bfloat16)
    b1 = params["b1"].reshape(1, D).astype(jnp.float32)
    w2 = params["w2"].reshape(1, D).astype(jnp.float32)
    b2 = params["b2"].reshape(1, 1).astype(jnp.float32)

    grid_spec = pltpu.PrefetchScalarGridSpec(
        num_scalar_prefetch=0,
        grid=(NP,),
        in_specs=[
            pl.BlockSpec((1, B * TP * K, KC), lambda j: (j, 0, 0)),   # xf block
            pl.BlockSpec((1, B * TP * K, KC), lambda j: (j, 0, 0)),   # xb block
            pl.BlockSpec((KC, F), lambda j: (0, 0)),                  # wf (resident)
            pl.BlockSpec((KC, F), lambda j: (0, 0)),                  # wb (resident)
            pl.BlockSpec((1, F), lambda j: (0, 0)),                   # bf
            pl.BlockSpec((1, F), lambda j: (0, 0)),                   # bb
            pl.BlockSpec((TP * F, D), lambda j: (j, 0)),              # w1f (streamed)
            pl.BlockSpec((TP * F, D), lambda j: (j, 0)),              # w1b (streamed)
            pl.BlockSpec((1, D), lambda j: (0, 0)),                   # b1
            pl.BlockSpec((1, D), lambda j: (0, 0)),                   # w2
            pl.BlockSpec((1, 1), lambda j: (0, 0)),                   # b2
        ],
        out_specs=pl.BlockSpec((B, 1), lambda j: (0, 0)),
        scratch_shapes=[
            pltpu.VMEM((B * TP * K, F), jnp.float32),   # conv + ReLU activations
            pltpu.VMEM((B * TP, F), jnp.float32),       # pooled activations
            pltpu.VMEM((B, D), jnp.float32),            # dense-layer accumulator
        ],
    )

    # Scoped-VMEM budget from the actually-resident buffers (double-buffered streamed blocks),
    # capped below v7x's 64 MiB physical VMEM.
    est = (2 * 2 * (B * TP * K * KC * 2)                      # x blocks, bf16, 2 strands, 2 bufs
           + 2 * 2 * (TP * F * D * 2)                         # w1 blocks, bf16, 2 strands, 2 bufs
           + (B * TP * K * F + B * TP * F + B * D) * 4        # scratch
           + 2 * KC * F * 2 + (2 * F + 2 * D + 2 + B) * 4)    # small resident params / output
    vmem_limit = int(min(64 * 2 ** 20, max(32 * 2 ** 20, 2 * est)))

    return pl.pallas_call(
        partial(_forward_kernel, K=K, TP=TP, B=B),
        out_shape=jax.ShapeDtypeStruct((B, 1), jnp.float32),
        grid_spec=grid_spec,
        compiler_params=pltpu.CompilerParams(
            dimension_semantics=("arbitrary",),   # reduction over streamed w1 row blocks
            vmem_limit_bytes=vmem_limit,
        ),
    )(xf, xb, wf, wb, bf, bb, w1f, w1b, b1, w2, b2)


def reference_forward(x, params, *, kernel_size, matmul_dtype=jnp.float32):
    """Pure-JAX reference mirroring the PyTorch module (eval mode).

    matmul_dtype=float32  -> PyTorch-equivalent math.
    matmul_dtype=bfloat16 -> mirrors the kernel's mixed-precision cast points exactly.
    """
    K = kernel_size
    prec = jax.lax.Precision.HIGHEST

    def branch(xi, w, b):
        Bn, C, L = xi.shape
        F = w.shape[0]
        pad_l = (K - 1) // 2
        xp = jnp.pad(jnp.transpose(xi, (0, 2, 1)), ((0, 0), (pad_l, K - 1 - pad_l), (0, 0)))
        xcol = jnp.concatenate([xp[:, k:k + L, :] for k in range(K)], axis=-1)    # (B, L, K*C)
        wk = jnp.transpose(w, (2, 1, 0)).reshape(K * C, F)
        h = jnp.einsum("blk,kf->blf", xcol.astype(matmul_dtype), wk.astype(matmul_dtype),
                       preferred_element_type=jnp.float32, precision=prec)
        h = jnp.maximum(h + b[None, None, :], 0.0)
        P = L // K
        return h[:, :P * K, :].reshape(Bn, P, K, F).max(axis=2)                   # (B, P, F)

    hf = branch(x[0], params["wf"], params["bf"])
    hb = branch(x[1], params["wb"], params["bb"])
    h = jnp.concatenate([hf, hb], axis=1)                        # (B, 2P, F)
    Bn, Q, F = h.shape
    flat = jnp.transpose(h, (0, 2, 1)).reshape(Bn, F * Q)        # PyTorch Flatten order f*2P+q
    y1 = jnp.dot(flat.astype(matmul_dtype), params["w1"].T.astype(matmul_dtype),
                 preferred_element_type=jnp.float32, precision=prec) + params["b1"]
    y1 = jnp.maximum(y1, 0.0)
    # Dropout(p=0.33): eval-mode identity.
    return jnp.dot(y1, params["w2"].T, precision=prec) + params["b2"]


def init_params(key, *, seq_len, in_channels, kernel_size, num_filters, dnn_size):
    ks = jax.random.split(key, 8)
    dnn_in = num_filters * (seq_len // kernel_size) * 2
    s = 0.1
    return {
        "wf": jax.random.normal(ks[0], (num_filters, in_channels, kernel_size), jnp.float32) * s,
        "bf": jax.random.normal(ks[1], (num_filters,), jnp.float32) * s,
        "wb": jax.random.normal(ks[2], (num_filters, in_channels, kernel_size), jnp.float32) * s,
        "bb": jax.random.normal(ks[3], (num_filters,), jnp.float32) * s,
        "w1": jax.random.normal(ks[4], (dnn_size, dnn_in), jnp.float32) * s,
        "b1": jax.random.normal(ks[5], (dnn_size,), jnp.float32) * s,
        "w2": jax.random.normal(ks[6], (1, dnn_size), jnp.float32) * s,
        "b2": jax.random.normal(ks[7], (1,), jnp.float32) * s,
    }


if __name__ == "__main__":
    # Small deterministic config consistent with the module defaults.
    SEQ_LEN = 16
    BATCH = 2
    IN_CH = 4          # nucleotides
    KSIZE = 4          # k-mer motif kernel size
    NUM_FILTERS = 32
    DNN_SIZE = 64      # shrunk from 512 for a small example

    key = jax.random.PRNGKey(0)
    kx, kp = jax.random.split(key)
    # x stacks (forward strand, backward strand): (2, B, C, L)
    x = jax.random.normal(kx, (2, BATCH, IN_CH, SEQ_LEN), jnp.float32)
    params = init_params(kp, seq_len=SEQ_LEN, in_channels=IN_CH,
                         kernel_size=KSIZE, num_filters=NUM_FILTERS,
                         dnn_size=DNN_SIZE)

    # block_pooled=2 -> 2 grid steps: exercises the streamed-w1 accumulator path.
    y = simple_cnn_forward(x, params, kernel_size=KSIZE, block_pooled=2)
    y = jax.block_until_ready(y)
    assert y.shape == (BATCH, 1), y.shape

    # Tight check against a reference that mirrors the kernel's bf16 matmul cast points.
    y_bf16 = reference_forward(x, params, kernel_size=KSIZE, matmul_dtype=jnp.bfloat16)
    assert jnp.allclose(y, y_bf16, atol=2e-3, rtol=2e-3), (y, y_bf16)

    # Loose check against the full-f32 PyTorch-equivalent reference (bf16 operand rounding).
    y_f32 = reference_forward(x, params, kernel_size=KSIZE, matmul_dtype=jnp.float32)
    assert jnp.allclose(y, y_f32, atol=3e-2, rtol=3e-2), (y, y_f32)

    print("KERNEL_OK")
</pallas_src>

<mosaic_0001>
module attributes {stable_mosaic.version = 11 : i64} {
  func.func @_forward_kernel(%arg0: i32, %arg1: memref<1x16x16xbf16, #tpu.memory_space<vmem>>, %arg2: memref<1x16x16xbf16, #tpu.memory_space<vmem>>, %arg3: memref<16x32xbf16, #tpu.memory_space<vmem>>, %arg4: memref<16x32xbf16, #tpu.memory_space<vmem>>, %arg5: memref<1x32xf32, #tpu.memory_space<vmem>>, %arg6: memref<1x32xf32, #tpu.memory_space<vmem>>, %arg7: memref<64x64xbf16, #tpu.memory_space<vmem>>, %arg8: memref<64x64xbf16, #tpu.memory_space<vmem>>, %arg9: memref<1x64xf32, #tpu.memory_space<vmem>>, %arg10: memref<1x64xf32, #tpu.memory_space<vmem>>, %arg11: memref<1x1xf32, #tpu.memory_space<vmem>>, %arg12: memref<2x1xf32, #tpu.memory_space<vmem>>, %arg13: memref<16x32xf32, #tpu.memory_space<vmem>>, %arg14: memref<4x32xf32, #tpu.memory_space<vmem>>, %arg15: memref<2x64xf32, #tpu.memory_space<vmem>>) attributes {dimension_semantics = [#tpu.dimension_semantics<arbitrary>], iteration_bounds = array<i64: 2>, scalar_prefetch = 0 : i64, scratch_operands = 3 : i64, tpu.core_type = #tpu.core_type<tc>, window_params = [{transform_indices = @transform_0, window_bounds = array<i64: 1, 16, 16>}, {transform_indices = @transform_1, window_bounds = array<i64: 1, 16, 16>}, {pipeline_mode = #tpu.pipeline_mode<synchronous>, transform_indices = @transform_2, window_bounds = array<i64: 16, 32>}, {pipeline_mode = #tpu.pipeline_mode<synchronous>, transform_indices = @transform_3, window_bounds = array<i64: 16, 32>}, {pipeline_mode = #tpu.pipeline_mode<synchronous>, transform_indices = @transform_4, window_bounds = array<i64: 1, 32>}, {pipeline_mode = #tpu.pipeline_mode<synchronous>, transform_indices = @transform_5, window_bounds = array<i64: 1, 32>}, {transform_indices = @transform_6, window_bounds = array<i64: 64, 64>}, {transform_indices = @transform_7, window_bounds = array<i64: 64, 64>}, {pipeline_mode = #tpu.pipeline_mode<synchronous>, transform_indices = @transform_8, window_bounds = array<i64: 1, 64>}, {pipeline_mode = #tpu.pipeline_mode<synchronous>, transform_indices = @transform_9, window_bounds = array<i64: 1, 64>}, {pipeline_mode = #tpu.pipeline_mode<synchronous>, transform_indices = @transform_10, window_bounds = array<i64: 1, 1>}, {pipeline_mode = #tpu.pipeline_mode<synchronous>, transform_indices = @transform_11, window_bounds = array<i64: 2, 1>}]} {
    %c0_i32 = arith.constant 0 : i32
    %0 = arith.cmpi eq, %arg0, %c0_i32 : i32
    %1 = arith.extui %0 : i1 to i32
    %c0_i32_0 = arith.constant 0 : i32
    %2 = arith.cmpi ne, %1, %c0_i32_0 : i32
    scf.if %2 {
      %cst_61 = arith.constant 0.000000e+00 : f32
      %60 = vector.broadcast %cst_61 : f32 to vector<2x64xf32>
      %c0_62 = arith.constant 0 : index
      %c0_63 = arith.constant 0 : index
      %61 = vector.load %arg15[%c0_62, %c0_63] : memref<2x64xf32, #tpu.memory_space<vmem>>, vector<2x64xf32>
      tpu.vector_store %arg15[%c0_62, %c0_63], %60 {strides = array<i32>} : memref<2x64xf32, #tpu.memory_space<vmem>>, vector<2x64xf32>,
    } else {
    }
    %c0 = arith.constant 0 : index
    %c0_1 = arith.constant 0 : index
    %c0_2 = arith.constant 0 : index
    %3 = vector.load %arg1[%c0, %c0_1, %c0_2] : memref<1x16x16xbf16, #tpu.memory_space<vmem>>, vector<1x16x16xbf16>
    %4 = vector.shape_cast %3 : vector<1x16x16xbf16> to vector<16x16xbf16>
    %c0_3 = arith.constant 0 : index
    %c0_4 = arith.constant 0 : index
    %5 = vector.load %arg3[%c0_3, %c0_4] : memref<16x32xbf16, #tpu.memory_space<vmem>>, vector<16x32xbf16>
    %cst = arith.constant dense<0.000000e+00> : vector<16x32xf32>
    %6 = tpu.matmul %4, %5, %cst {dimension_numbers = #tpu.dot_dimension_numbers<[1], [0], [0], [1], [0, 0, 1, 1], [], []>} : vector<16x16xbf16>, vector<16x32xbf16>, vector<16x32xf32> -> vector<16x32xf32>
    %c0_5 = arith.constant 0 : index
    %c0_6 = arith.constant 0 : index
    %7 = vector.load %arg5[%c0_5, %c0_6] : memref<1x32xf32, #tpu.memory_space<vmem>>, vector<1x32xf32>
    %8 = vector.broadcast %7 : vector<1x32xf32> to vector<16x32xf32>
    %9 = arith.addf %6, %8 : vector<16x32xf32>
    %cst_7 = arith.constant 0.000000e+00 : f32
    %10 = vector.broadcast %cst_7 : f32 to vector<16x32xf32>
    %11 = arith.maximumf %9, %10 : vector<16x32xf32>
    %c0_8 = arith.constant 0 : index
    %c0_9 = arith.constant 0 : index
    %12 = vector.load %arg13[%c0_8, %c0_9] : memref<16x32xf32, #tpu.memory_space<vmem>>, vector<16x32xf32>
    tpu.vector_store %arg13[%c0_8, %c0_9], %11 {strides = array<i32>} : memref<16x32xf32, #tpu.memory_space<vmem>>, vector<16x32xf32>,
    %c0_10 = arith.constant 0 : index
    %c0_11 = arith.constant 0 : index
    %13 = tpu.strided_load %arg13[%c0_10, %c0_11] {strides = array<i32: 4, 1>} : memref<16x32xf32, #tpu.memory_space<vmem>>, vector<4x32xf32>
    %c1 = arith.constant 1 : index
    %c0_12 = arith.constant 0 : index
    %14 = tpu.strided_load %arg13[%c1, %c0_12] {strides = array<i32: 4, 1>} : memref<16x32xf32, #tpu.memory_space<vmem>>, vector<4x32xf32>
    %15 = arith.maximumf %13, %14 : vector<4x32xf32>
    %c2 = arith.constant 2 : index
    %c0_13 = arith.constant 0 : index
    %16 = tpu.strided_load %arg13[%c2, %c0_13] {strides = array<i32: 4, 1>} : memref<16x32xf32, #tpu.memory_space<vmem>>, vector<4x32xf32>
    %17 = arith.maximumf %15, %16 : vector<4x32xf32>
    %c3 = arith.constant 3 : index
    %c0_14 = arith.constant 0 : index
    %18 = tpu.strided_load %arg13[%c3, %c0_14] {strides = array<i32: 4, 1>} : memref<16x32xf32, #tpu.memory_space<vmem>>, vector<4x32xf32>
    %19 = arith.maximumf %17, %18 : vector<4x32xf32>
    %c0_15 = arith.constant 0 : index
    %c0_16 = arith.constant 0 : index
    %20 = vector.load %arg14[%c0_15, %c0_16] : memref<4x32xf32, #tpu.memory_space<vmem>>, vector<4x32xf32>
    tpu.vector_store %arg14[%c0_15, %c0_16], %19 {strides = array<i32>} : memref<4x32xf32, #tpu.memory_space<vmem>>, vector<4x32xf32>,
    %c0_17 = arith.constant 0 : index
    %c0_18 = arith.constant 0 : index
    %21 = tpu.strided_load %arg14[%c0_17, %c0_18] {strides = array<i32: 2, 1>} : memref<4x32xf32, #tpu.memory_space<vmem>>, vector<2x32xf32>
    %c1_19 = arith.constant 1 : index
    %c0_20 = arith.constant 0 : index
    %22 = tpu.strided_load %arg14[%c1_19, %c0_20] {strides = array<i32: 2, 1>} : memref<4x32xf32, #tpu.memory_space<vmem>>, vector<2x32xf32>
    %23 = tpu.concatenate %21, %22 in 1 : vector<2x32xf32>, vector<2x32xf32> -> vector<2x64xf32>
    %c0_21 = arith.constant 0 : index
    %c0_22 = arith.constant 0 : index
    %24 = vector.load %arg15[%c0_21, %c0_22] : memref<2x64xf32, #tpu.memory_space<vmem>>, vector<2x64xf32>
    %25 = arith.truncf %23 : vector<2x64xf32> to vector<2x64xbf16>
    %c0_23 = arith.constant 0 : index
    %c0_24 = arith.constant 0 : index
    %26 = vector.load %arg7[%c0_23, %c0_24] : memref<64x64xbf16, #tpu.memory_space<vmem>>, vector<64x64xbf16>
    %cst_25 = arith.constant dense<0.000000e+00> : vector<2x64xf32>
    %27 = tpu.matmul %25, %26, %cst_25 {dimension_numbers = #tpu.dot_dimension_numbers<[1], [0], [0], [1], [0, 0, 1, 1], [], []>} : vector<2x64xbf16>, vector<64x64xbf16>, vector<2x64xf32> -> vector<2x64xf32>
    %28 = arith.addf %24, %27 : vector<2x64xf32>
    %c0_26 = arith.constant 0 : index
    %c0_27 = arith.constant 0 : index
    %29 = vector.load %arg15[%c0_26, %c0_27] : memref<2x64xf32, #tpu.memory_space<vmem>>, vector<2x64xf32>
    tpu.vector_store %arg15[%c0_26, %c0_27], %28 {strides = array<i32>} : memref<2x64xf32, #tpu.memory_space<vmem>>, vector<2x64xf32>,
    %c0_28 = arith.constant 0 : index
    %c0_29 = arith.constant 0 : index
    %c0_30 = arith.constant 0 : index
    %30 = vector.load %arg2[%c0_28, %c0_29, %c0_30] : memref<1x16x16xbf16, #tpu.memory_space<vmem>>, vector<1x16x16xbf16>
    %31 = vector.shape_cast %30 : vector<1x16x16xbf16> to vector<16x16xbf16>
    %c0_31 = arith.constant 0 : index
    %c0_32 = arith.constant 0 : index
    %32 = vector.load %arg4[%c0_31, %c0_32] : memref<16x32xbf16, #tpu.memory_space<vmem>>, vector<16x32xbf16>
    %cst_33 = arith.constant dense<0.000000e+00> : vector<16x32xf32>
    %33 = tpu.matmul %31, %32, %cst_33 {dimension_numbers = #tpu.dot_dimension_numbers<[1], [0], [0], [1], [0, 0, 1, 1], [], []>} : vector<16x16xbf16>, vector<16x32xbf16>, vector<16x32xf32> -> vector<16x32xf32>
    %c0_34 = arith.constant 0 : index
    %c0_35 = arith.constant 0 : index
    %34 = vector.load %arg6[%c0_34, %c0_35] : memref<1x32xf32, #tpu.memory_space<vmem>>, vector<1x32xf32>
    %35 = vector.broadcast %34 : vector<1x32xf32> to vector<16x32xf32>
    %36 = arith.addf %33, %35 : vector<16x32xf32>
    %cst_36 = arith.constant 0.000000e+00 : f32
    %37 = vector.broadcast %cst_36 : f32 to vector<16x32xf32>
    %38 = arith.maximumf %36, %37 : vector<16x32xf32>
    %c0_37 = arith.constant 0 : index
    %c0_38 = arith.constant 0 : index
    %39 = vector.load %arg13[%c0_37, %c0_38] : memref<16x32xf32, #tpu.memory_space<vmem>>, vector<16x32xf32>
    tpu.vector_store %arg13[%c0_37, %c0_38], %38 {strides = array<i32>} : memref<16x32xf32, #tpu.memory_space<vmem>>, vector<16x32xf32>,
    %c0_39 = arith.constant 0 : index
    %c0_40 = arith.constant 0 : index
    %40 = tpu.strided_load %arg13[%c0_39, %c0_40] {strides = array<i32: 4, 1>} : memref<16x32xf32, #tpu.memory_space<vmem>>, vector<4x32xf32>
    %c1_41 = arith.constant 1 : index
    %c0_42 = arith.constant 0 : index
    %41 = tpu.strided_load %arg13[%c1_41, %c0_42] {strides = array<i32: 4, 1>} : memref<16x32xf32, #tpu.memory_space<vmem>>, vector<4x32xf32>
    %42 = arith.maximumf %40, %41 : vector<4x32xf32>
    %c2_43 = arith.constant 2 : index
    %c0_44 = arith.constant 0 : index
    %43 = tpu.strided_load %arg13[%c2_43, %c0_44] {strides = array<i32: 4, 1>} : memref<16x32xf32, #tpu.memory_space<vmem>>, vector<4x32xf32>
    %44 = arith.maximumf %42, %43 : vector<4x32xf32>
    %c3_45 = arith.constant 3 : index
    %c0_46 = arith.constant 0 : index
    %45 = tpu.strided_load %arg13[%c3_45, %c0_46] {strides = array<i32: 4, 1>} : memref<16x32xf32, #tpu.memory_space<vmem>>, vector<4x32xf32>
    %46 = arith.maximumf %44, %45 : vector<4x32xf32>
    %c0_47 = arith.constant 0 : index
    %c0_48 = arith.constant 0 : index
    %47 = vector.load %arg14[%c0_47, %c0_48] : memref<4x32xf32, #tpu.memory_space<vmem>>, vector<4x32xf32>
    tpu.vector_store %arg14[%c0_47, %c0_48], %46 {strides = array<i32>} : memref<4x32xf32, #tpu.memory_space<vmem>>, vector<4x32xf32>,
    %c0_49 = arith.constant 0 : index
    %c0_50 = arith.constant 0 : index
    %48 = tpu.strided_load %arg14[%c0_49, %c0_50] {strides = array<i32: 2, 1>} : memref<4x32xf32, #tpu.memory_space<vmem>>, vector<2x32xf32>
    %c1_51 = arith.constant 1 : index
    %c0_52 = arith.constant 0 : index
    %49 = tpu.strided_load %arg14[%c1_51, %c0_52] {strides = array<i32: 2, 1>} : memref<4x32xf32, #tpu.memory_space<vmem>>, vector<2x32xf32>
    %50 = tpu.concatenate %48, %49 in 1 : vector<2x32xf32>, vector<2x32xf32> -> vector<2x64xf32>
    %c0_53 = arith.constant 0 : index
    %c0_54 = arith.constant 0 : index
    %51 = vector.load %arg15[%c0_53, %c0_54] : memref<2x64xf32, #tpu.memory_space<vmem>>, vector<2x64xf32>
    %52 = arith.truncf %50 : vector<2x64xf32> to vector<2x64xbf16>
    %c0_55 = arith.constant 0 : index
    %c0_56 = arith.constant 0 : index
    %53 = vector.load %arg8[%c0_55, %c0_56] : memref<64x64xbf16, #tpu.memory_space<vmem>>, vector<64x64xbf16>
    %cst_57 = arith.constant dense<0.000000e+00> : vector<2x64xf32>
    %54 = tpu.matmul %52, %53, %cst_57 {dimension_numbers = #tpu.dot_dimension_numbers<[1], [0], [0], [1], [0, 0, 1, 1], [], []>} : vector<2x64xbf16>, vector<64x64xbf16>, vector<2x64xf32> -> vector<2x64xf32>
    %55 = arith.addf %51, %54 : vector<2x64xf32>
    %c0_58 = arith.constant 0 : index
    %c0_59 = arith.constant 0 : index
    %56 = vector.load %arg15[%c0_58, %c0_59] : memref<2x64xf32, #tpu.memory_space<vmem>>, vector<2x64xf32>
    tpu.vector_store %arg15[%c0_58, %c0_59], %55 {strides = array<i32>} : memref<2x64xf32, #tpu.memory_space<vmem>>, vector<2x64xf32>,
    %c1_i32 = arith.constant 1 : i32
    %57 = arith.cmpi eq, %arg0, %c1_i32 : i32
    %58 = arith.extui %57 : i1 to i32
    %c0_i32_60 = arith.constant 0 : i32
    %59 = arith.cmpi ne, %58, %c0_i32_60 : i32
    scf.if %59 {
      %c0_61 = arith.constant 0 : index
      %c0_62 = arith.constant 0 : index
      %60 = vector.load %arg15[%c0_61, %c0_62] : memref<2x64xf32, #tpu.memory_space<vmem>>, vector<2x64xf32>
      %c0_63 = arith.constant 0 : index
      %c0_64 = arith.constant 0 : index
      %61 = vector.load %arg9[%c0_63, %c0_64] : memref<1x64xf32, #tpu.memory_space<vmem>>, vector<1x64xf32>
      %62 = vector.broadcast %61 : vector<1x64xf32> to vector<2x64xf32>
      %63 = arith.addf %60, %62 : vector<2x64xf32>
      %cst_65 = arith.constant 0.000000e+00 : f32
      %64 = vector.broadcast %cst_65 : f32 to vector<2x64xf32>
      %65 = arith.maximumf %63, %64 : vector<2x64xf32>
      %c0_66 = arith.constant 0 : index
      %c0_67 = arith.constant 0 : index
      %66 = vector.load %arg10[%c0_66, %c0_67] : memref<1x64xf32, #tpu.memory_space<vmem>>, vector<1x64xf32>
      %67 = vector.broadcast %66 : vector<1x64xf32> to vector<2x64xf32>
      %68 = arith.mulf %65, %67 : vector<2x64xf32>
      %cst_68 = arith.constant dense<0.000000e+00> : vector<2xf32>
      %69 = vector.multi_reduction <add>, %68, %cst_68 [1] : vector<2x64xf32> to vector<2xf32>
      %70 = vector.shape_cast %69 : vector<2xf32> to vector<2x1xf32>
      %c0_69 = arith.constant 0 : index
      %c0_70 = arith.constant 0 : index
      %71 = vector.load %arg11[%c0_69, %c0_70] : memref<1x1xf32, #tpu.memory_space<vmem>>, vector<1x1xf32>
      %72 = vector.broadcast %71 : vector<1x1xf32> to vector<2x1xf32>
      %73 = arith.addf %70, %72 : vector<2x1xf32>
      %c0_71 = arith.constant 0 : index
      %c0_72 = arith.constant 0 : index
      %74 = vector.load %arg12[%c0_71, %c0_72] : memref<2x1xf32, #tpu.memory_space<vmem>>, vector<2x1xf32>
      tpu.vector_store %arg12[%c0_71, %c0_72], %73 {strides = array<i32>} : memref<2x1xf32, #tpu.memory_space<vmem>>, vector<2x1xf32>,
    } else {
    }
    return
  }
  func.func @transform_0(%arg0: i32) -> (i32, i32, i32) {
    %c0_i32 = arith.constant 0 : i32
    %c0_i32_0 = arith.constant 0 : i32
    %c0_i32_1 = arith.constant 0 : i32
    return %arg0, %c0_i32, %c0_i32_0 : i32, i32, i32
  }
  func.func @transform_1(%arg0: i32) -> (i32, i32, i32) {
    %c0_i32 = arith.constant 0 : i32
    %c0_i32_0 = arith.constant 0 : i32
    %c0_i32_1 = arith.constant 0 : i32
    return %arg0, %c0_i32, %c0_i32_0 : i32, i32, i32
  }
  func.func @transform_2(%arg0: i32) -> (i32, i32) {
    %c0_i32 = arith.constant 0 : i32
    %c0_i32_0 = arith.constant 0 : i32
    %c0_i32_1 = arith.constant 0 : i32
    return %c0_i32, %c0_i32_0 : i32, i32
  }
  func.func @transform_3(%arg0: i32) -> (i32, i32) {
    %c0_i32 = arith.constant 0 : i32
    %c0_i32_0 = arith.constant 0 : i32
    %c0_i32_1 = arith.constant 0 : i32
    return %c0_i32, %c0_i32_0 : i32, i32
  }
  func.func @transform_4(%arg0: i32) -> (i32, i32) {
    %c0_i32 = arith.constant 0 : i32
    %c0_i32_0 = arith.constant 0 : i32
    %c0_i32_1 = arith.constant 0 : i32
    return %c0_i32, %c0_i32_0 : i32, i32
  }
  func.func @transform_5(%arg0: i32) -> (i32, i32) {
    %c0_i32 = arith.constant 0 : i32
    %c0_i32_0 = arith.constant 0 : i32
    %c0_i32_1 = arith.constant 0 : i32
    return %c0_i32, %c0_i32_0 : i32, i32
  }
  func.func @transform_6(%arg0: i32) -> (i32, i32) {
    %c0_i32 = arith.constant 0 : i32
    %c0_i32_0 = arith.constant 0 : i32
    return %arg0, %c0_i32 : i32, i32
  }
  func.func @transform_7(%arg0: i32) -> (i32, i32) {
    %c0_i32 = arith.constant 0 : i32
    %c0_i32_0 = arith.constant 0 : i32
    return %arg0, %c0_i32 : i32, i32
  }
  func.func @transform_8(%arg0: i32) -> (i32, i32) {
    %c0_i32 = arith.constant 0 : i32
    %c0_i32_0 = arith.constant 0 : i32
    %c0_i32_1 = arith.constant 0 : i32
    return %c0_i32, %c0_i32_0 : i32, i32
  }
  func.func @transform_9(%arg0: i32) -> (i32, i32) {
    %c0_i32 = arith.constant 0 : i32
    %c0_i32_0 = arith.constant 0 : i32
    %c0_i32_1 = arith.constant 0 : i32
    return %c0_i32, %c0_i32_0 : i32, i32
  }
  func.func @transform_10(%arg0: i32) -> (i32, i32) {
    %c0_i32 = arith.constant 0 : i32
    %c0_i32_0 = arith.constant 0 : i32
    %c0_i32_1 = arith.constant 0 : i32
    return %c0_i32, %c0_i32_0 : i32, i32
  }
  func.func @transform_11(%arg0: i32) -> (i32, i32) {
    %c0_i32 = arith.constant 0 : i32
    %c0_i32_0 = arith.constant 0 : i32
    %c0_i32_1 = arith.constant 0 : i32
    return %c0_i32, %c0_i32_0 : i32, i32
  }
}

</mosaic_0001>

<llo_original>
// kernel: tpu_custom_call.1
$region0: #{tpu_custom_call.1}
  #allocation0 [shape = 'u32[]', space=smem, size = 0x4, offset = 0x4, fixed_abs, tag = 'smem constant byte address 0x4 - core index']
  #allocation1 [shape = 'u32[72,128]{1,0:T(1,128)}', space=vmem, size = 0x9000, scoped, tag = 'internal scratch']
  #allocation2 [shape = 'f32[16,32]{1,0:T(8,128)}', space=vmem, size = 0x2000, scoped, tag = 'scratch operand']
  #allocation3 [shape = 'f32[4,32]{1,0:T(4,128)}', space=vmem, size = 0x800, scoped, tag = 'scratch operand']
  #allocation4 [shape = 'f32[2,64]{1,0:T(2,128)}', space=vmem, size = 0x400, scoped, tag = 'scratch operand']
  #allocation5 [shape = 'f32[1,1]{1,0:T(1,128)S(1)}', space=vmem, size = 0x200, scoped, tag = 'scoped memory for tpu_custom_call.1']
  %s0 = inlined_call_operand.vmem [shape: bf16[2,16,16], index: 0, kind: input, shape index: {}]
  %s1 = inlined_call_operand.vmem [shape: bf16[2,16,16], index: 1, kind: input, shape index: {}]
  %s2 = inlined_call_operand.vmem [shape: bf16[16,32], index: 2, kind: input, shape index: {}]
  %s3 = inlined_call_operand.vmem [shape: bf16[16,32], index: 3, kind: input, shape index: {}]
  %s4 = inlined_call_operand.vmem [shape: f32[1,32], index: 4, kind: input, shape index: {}]
  %s5 = inlined_call_operand.vmem [shape: f32[1,32], index: 5, kind: input, shape index: {}]
  %s6 = inlined_call_operand.vmem [shape: bf16[128,64], index: 6, kind: input, shape index: {}]
  %s7 = inlined_call_operand.vmem [shape: bf16[128,64], index: 7, kind: input, shape index: {}]
  %s8 = inlined_call_operand.vmem [shape: f32[1,64], index: 8, kind: input, shape index: {}]
  %s9 = inlined_call_operand.vmem [shape: f32[1,64], index: 9, kind: input, shape index: {}]
  %s10 = inlined_call_operand.<no memory space> [shape: f32[1,1], index: 10, kind: input, shape index: {}]
  %s11 = inlined_call_operand.vmem [shape: f32[2,1], index: 11, kind: output, shape index: {}]
  %s12 = sld [smem:[#allocation0]]
  $region85: #{tpu_custom_call.1} parent=0
    _
  %s14 = ssub.s32 1, %s12
  %s15 = scalar_select 0, %s14, %s12
  %v16 = vstv %s10
  %17 = vst [vmem:[#allocation5] sm:$0x1] %v16
  loop: start=0, step=1, limit=4
  $region2: #{tpu_custom_call.1} parent=0 // loop_pre_header
    _
  $region3: #{tpu_custom_call.1} parent=0 // loop_header
    %s19 = sphi 0, %s23
    %p20 = scmp.ge.s32.totalorder %s19, 4
    %s29 = sphi 0, %s31
    %s32 = sphi 0, %s29
    %s33 = sphi 0, %s32
    %s49 = sphi 0, %s33
    %s55 = sphi 0, %s57
    %s58 = sphi 0, %s55
    %s59 = sphi 0, %s58
    %s75 = sphi 0, %s59
    %s79 = sphi 0, %s79
    %s81 = sphi 0, %s79
    %s82 = sphi 0, %s81
    %s96 = sphi 0, %s82
    %s100 = sphi 0, %s100
    %s102 = sphi 0, %s100
    %s103 = sphi 0, %s102
    %s117 = sphi 0, %s103
    %s121 = sphi 0, %s121
    %s123 = sphi 0, %s121
    %s124 = sphi 0, %s123
    %s138 = sphi 0, %s124
    %s142 = sphi 0, %s142
    %s144 = sphi 0, %s142
    %s145 = sphi 0, %s144
    %s159 = sphi 0, %s145
    %s165 = sphi 0, %s167
    %s168 = sphi 0, %s165
    %s169 = sphi 0, %s168
    %s185 = sphi 0, %s169
    %s191 = sphi 0, %s193
    %s194 = sphi 0, %s191
    %s195 = sphi 0, %s194
    %s211 = sphi 0, %s195
    %s215 = sphi 0, %s215
    %s217 = sphi 0, %s215
    %s218 = sphi 0, %s217
    %s232 = sphi 0, %s218
    %s236 = sphi 0, %s236
    %s238 = sphi 0, %s236
    %s239 = sphi 0, %s238
    %s253 = sphi 0, %s239
    %s257 = sphi 0, %s257
    %s259 = sphi 0, %s257
    %s260 = sphi 0, %s259
    %s274 = sphi 0, %s260
    %s278 = sphi 0, %s278
    %s280 = sphi 0, %s278
    %s281 = sphi 0, %s280
    %s295 = sphi 0, %s281
  $region4: #{tpu_custom_call.1} parent=0 // loop_header_branch
    %22 = sbr.rel (%p20) target = $region8
  $region5: #{tpu_custom_call.1} parent=0 // loop_body
    %s24 = ssub.s32 %s19, 1
    %s25 = ssub.s32 %s19, 2
    %s26 = sadd.s32 %s19, 1
    %s27 = ssub.s32 %s19, %s26
    %p28 = scmp.eq.s32.totalorder %s27, 0
    %s30 = sadd.s32 %s29, 1
    %s31 = scalar_select %p28, %s29, %s30
    %p34 = pneg %p28
    %p35 = scmp.eq.s32.totalorder %s19, 1
    %p36 = por %p34, %p35
    %p37 = scmp.ne.s32.totalorder %s29, %s32
    %p38 = scmp.eq.s32.totalorder %s19, 0
    %p39 = por %p37, %p38
    %p40 = scmp.ne.s32.totalorder %s29, %s32
    %p41 = scmp.eq.s32.totalorder %s24, 1
    %p42 = por %p40, %p41
    %p43 = scmp.ne.s32.totalorder %s32, %s33
    %p44 = scmp.eq.s32.totalorder %s24, 0
    %p45 = por %p43, %p44
    %p46 = scmp.ne.s32.totalorder %s32, %s33
    %p47 = scmp.eq.s32.totalorder %s25, 1
    %p48 = por %p46, %p47
    %p50 = scmp.ne.s32.totalorder %s33, %s49
    %p51 = scmp.eq.s32.totalorder %s25, 0
    %p52 = por %p50, %p51
    %s53 = ssub.s32 %s19, %s26
    %p54 = scmp.eq.s32.totalorder %s53, 0
    %s56 = sadd.s32 %s55, 1
    %s57 = scalar_select %p54, %s55, %s56
    %p60 = pneg %p54
    %p61 = scmp.eq.s32.totalorder %s19, 1
    %p62 = por %p60, %p61
    %p63 = scmp.ne.s32.totalorder %s55, %s58
    %p64 = scmp.eq.s32.totalorder %s19, 0
    %p65 = por %p63, %p64
    %p66 = scmp.ne.s32.totalorder %s55, %s58
    %p67 = scmp.eq.s32.totalorder %s24, 1
    %p68 = por %p66, %p67
    %p69 = scmp.ne.s32.totalorder %s58, %s59
    %p70 = scmp.eq.s32.totalorder %s24, 0
    %p71 = por %p69, %p70
    %p72 = scmp.ne.s32.totalorder %s58, %s59
    %p73 = scmp.eq.s32.totalorder %s25, 1
    %p74 = por %p72, %p73
    %p76 = scmp.ne.s32.totalorder %s59, %s75
    %p77 = scmp.eq.s32.totalorder %s25, 0
    %p78 = por %p76, %p77
    %s80 = sadd.s32 %s79, 1
    %p83 = scmp.eq.s32.totalorder %s19, 1
    %p84 = scmp.ne.s32.totalorder %s79, %s81
    %p85 = scmp.eq.s32.totalorder %s19, 0
    %p86 = por %p84, %p85
    %p87 = scmp.ne.s32.totalorder %s79, %s81
    %p88 = scmp.eq.s32.totalorder %s24, 1
    %p89 = por %p87, %p88
    %p90 = scmp.ne.s32.totalorder %s81, %s82
    %p91 = scmp.eq.s32.totalorder %s24, 0
    %p92 = por %p90, %p91
    %p93 = scmp.ne.s32.totalorder %s81, %s82
    %p94 = scmp.eq.s32.totalorder %s25, 1
    %p95 = por %p93, %p94
    %p97 = scmp.ne.s32.totalorder %s82, %s96
    %p98 = scmp.eq.s32.totalorder %s25, 0
    %p99 = por %p97, %p98
    %s101 = sadd.s32 %s100, 1
    %p104 = scmp.eq.s32.totalorder %s19, 1
    %p105 = scmp.ne.s32.totalorder %s100, %s102
    %p106 = scmp.eq.s32.totalorder %s19, 0
    %p107 = por %p105, %p106
    %p108 = scmp.ne.s32.totalorder %s100, %s102
    %p109 = scmp.eq.s32.totalorder %s24, 1
    %p110 = por %p108, %p109
    %p111 = scmp.ne.s32.totalorder %s102, %s103
    %p112 = scmp.eq.s32.totalorder %s24, 0
    %p113 = por %p111, %p112
    %p114 = scmp.ne.s32.totalorder %s102, %s103
    %p115 = scmp.eq.s32.totalorder %s25, 1
    %p116 = por %p114, %p115
    %p118 = scmp.ne.s32.totalorder %s103, %s117
    %p119 = scmp.eq.s32.totalorder %s25, 0
    %p120 = por %p118, %p119
    %s122 = sadd.s32 %s121, 1
    %p125 = scmp.eq.s32.totalorder %s19, 1
    %p126 = scmp.ne.s32.totalorder %s121, %s123
    %p127 = scmp.eq.s32.totalorder %s19, 0
    %p128 = por %p126, %p127
    %p129 = scmp.ne.s32.totalorder %s121, %s123
    %p130 = scmp.eq.s32.totalorder %s24, 1
    %p131 = por %p129, %p130
    %p132 = scmp.ne.s32.totalorder %s123, %s124
    %p133 = scmp.eq.s32.totalorder %s24, 0
    %p134 = por %p132, %p133
    %p135 = scmp.ne.s32.totalorder %s123, %s124
    %p136 = scmp.eq.s32.totalorder %s25, 1
    %p137 = por %p135, %p136
    %p139 = scmp.ne.s32.totalorder %s124, %s138
    %p140 = scmp.eq.s32.totalorder %s25, 0
    %p141 = por %p139, %p140
    %s143 = sadd.s32 %s142, 1
    %p146 = scmp.eq.s32.totalorder %s19, 1
    %p147 = scmp.ne.s32.totalorder %s142, %s144
    %p148 = scmp.eq.s32.totalorder %s19, 0
    %p149 = por %p147, %p148
    %p150 = scmp.ne.s32.totalorder %s142, %s144
    %p151 = scmp.eq.s32.totalorder %s24, 1
    %p152 = por %p150, %p151
    %p153 = scmp.ne.s32.totalorder %s144, %s145
    %p154 = scmp.eq.s32.totalorder %s24, 0
    %p155 = por %p153, %p154
    %p156 = scmp.ne.s32.totalorder %s144, %s145
    %p157 = scmp.eq.s32.totalorder %s25, 1
    %p158 = por %p156, %p157
    %p160 = scmp.ne.s32.totalorder %s145, %s159
    %p161 = scmp.eq.s32.totalorder %s25, 0
    %p162 = por %p160, %p161
    %s163 = ssub.s32 %s19, %s26
    %p164 = scmp.eq.s32.totalorder %s163, 0
    %s166 = sadd.s32 %s165, 1
    %s167 = scalar_select %p164, %s165, %s166
    %p170 = pneg %p164
    %p171 = scmp.eq.s32.totalorder %s19, 1
    %p172 = por %p170, %p171
    %p173 = scmp.ne.s32.totalorder %s165, %s168
    %p174 = scmp.eq.s32.totalorder %s19, 0
    %p175 = por %p173, %p174
    %p176 = scmp.ne.s32.totalorder %s165, %s168
    %p177 = scmp.eq.s32.totalorder %s24, 1
    %p178 = por %p176, %p177
    %p179 = scmp.ne.s32.totalorder %s168, %s169
    %p180 = scmp.eq.s32.totalorder %s24, 0
    %p181 = por %p179, %p180
    %p182 = scmp.ne.s32.totalorder %s168, %s169
    %p183 = scmp.eq.s32.totalorder %s25, 1
    %p184 = por %p182, %p183
    %p186 = scmp.ne.s32.totalorder %s169, %s185
    %p187 = scmp.eq.s32.totalorder %s25, 0
    %p188 = por %p186, %p187
    %s189 = ssub.s32 %s19, %s26
    %p190 = scmp.eq.s32.totalorder %s189, 0
    %s192 = sadd.s32 %s191, 1
    %s193 = scalar_select %p190, %s191, %s192
    %p196 = pneg %p190
    %p197 = scmp.eq.s32.totalorder %s19, 1
    %p198 = por %p196, %p197
    %p199 = scmp.ne.s32.totalorder %s191, %s194
    %p200 = scmp.eq.s32.totalorder %s19, 0
    %p201 = por %p199, %p200
    %p202 = scmp.ne.s32.totalorder %s191, %s194
    %p203 = scmp.eq.s32.totalorder %s24, 1
    %p204 = por %p202, %p203
    %p205 = scmp.ne.s32.totalorder %s194, %s195
    %p206 = scmp.eq.s32.totalorder %s24, 0
    %p207 = por %p205, %p206
    %p208 = scmp.ne.s32.totalorder %s194, %s195
    %p209 = scmp.eq.s32.totalorder %s25, 1
    %p210 = por %p208, %p209
    %p212 = scmp.ne.s32.totalorder %s195, %s211
    %p213 = scmp.eq.s32.totalorder %s25, 0
    %p214 = por %p212, %p213
    %s216 = sadd.s32 %s215, 1
    %p219 = scmp.eq.s32.totalorder %s19, 1
    %p220 = scmp.ne.s32.totalorder %s215, %s217
    %p221 = scmp.eq.s32.totalorder %s19, 0
    %p222 = por %p220, %p221
    %p223 = scmp.ne.s32.totalorder %s215, %s217
    %p224 = scmp.eq.s32.totalorder %s24, 1
    %p225 = por %p223, %p224
    %p226 = scmp.ne.s32.totalorder %s217, %s218
    %p227 = scmp.eq.s32.totalorder %s24, 0
    %p228 = por %p226, %p227
    %p229 = scmp.ne.s32.totalorder %s217, %s218
    %p230 = scmp.eq.s32.totalorder %s25, 1
    %p231 = por %p229, %p230
    %p233 = scmp.ne.s32.totalorder %s218, %s232
    %p234 = scmp.eq.s32.totalorder %s25, 0
    %p235 = por %p233, %p234
    %s237 = sadd.s32 %s236, 1
    %p240 = scmp.eq.s32.totalorder %s19, 1
    %p241 = scmp.ne.s32.totalorder %s236, %s238
    %p242 = scmp.eq.s32.totalorder %s19, 0
    %p243 = por %p241, %p242
    %p244 = scmp.ne.s32.totalorder %s236, %s238
    %p245 = scmp.eq.s32.totalorder %s24, 1
    %p246 = por %p244, %p245
    %p247 = scmp.ne.s32.totalorder %s238, %s239
    %p248 = scmp.eq.s32.totalorder %s24, 0
    %p249 = por %p247, %p248
    %p250 = scmp.ne.s32.totalorder %s238, %s239
    %p251 = scmp.eq.s32.totalorder %s25, 1
    %p252 = por %p250, %p251
    %p254 = scmp.ne.s32.totalorder %s239, %s253
    %p255 = scmp.eq.s32.totalorder %s25, 0
    %p256 = por %p254, %p255
    %s258 = sadd.s32 %s257, 1
    %p261 = scmp.eq.s32.totalorder %s19, 1
    %p262 = scmp.ne.s32.totalorder %s257, %s259
    %p263 = scmp.eq.s32.totalorder %s19, 0
    %p264 = por %p262, %p263
    %p265 = scmp.ne.s32.totalorder %s257, %s259
    %p266 = scmp.eq.s32.totalorder %s24, 1
    %p267 = por %p265, %p266
    %p268 = scmp.ne.s32.totalorder %s259, %s260
    %p269 = scmp.eq.s32.totalorder %s24, 0
    %p270 = por %p268, %p269
    %p271 = scmp.ne.s32.totalorder %s259, %s260
    %p272 = scmp.eq.s32.totalorder %s25, 1
    %p273 = por %p271, %p272
    %p275 = scmp.ne.s32.totalorder %s260, %s274
    %p276 = scmp.eq.s32.totalorder %s25, 0
    %p277 = por %p275, %p276
    %s279 = sadd.s32 %s278, 1
    %p282 = scmp.eq.s32.totalorder %s19, 1
    %p283 = scmp.ne.s32.totalorder %s278, %s280
    %p284 = scmp.eq.s32.totalorder %s19, 0
    %p285 = por %p283, %p284
    %p286 = scmp.ne.s32.totalorder %s278, %s280
    %p287 = scmp.eq.s32.totalorder %s24, 1
    %p288 = por %p286, %p287
    %p289 = scmp.ne.s32.totalorder %s280, %s281
    %p290 = scmp.eq.s32.totalorder %s24, 0
    %p291 = por %p289, %p290
    %p292 = scmp.ne.s32.totalorder %s280, %s281
    %p293 = scmp.eq.s32.totalorder %s25, 1
    %p294 = por %p292, %p293
    %p296 = scmp.ne.s32.totalorder %s281, %s295
    %p297 = scmp.eq.s32.totalorder %s25, 0
    %p298 = por %p296, %p297
    %p299 = scmp.le.s32.totalorder 1, %s19
    %p300 = scmp.lt.s32.totalorder %s19, 3
    %p301 = pnand %p299, %p300
    %p302 = pneg %p301
    // Predicated region
    $region9: #{tpu_custom_call.1} parent=5 // pred_check
      _
    $region10: #{tpu_custom_call.1} parent=5 // pred_check_branch
      %304 = sbr.rel (%p301) target = $region12
    $region11: #{tpu_custom_call.1} parent=5 // pred_region
      %s305 = ssub.s32 %s19, 1
      // Predicated region
      $region13: #{tpu_custom_call.1} parent=11 // pred_check
        %p306 = pneg %p92
      $region14: #{tpu_custom_call.1} parent=11 // pred_check_branch
        %308 = sbr.rel (%p306) target = $region16
      $region15: #{tpu_custom_call.1} parent=11 // pred_region
        _
      $region16: #{tpu_custom_call.1} parent=11 // pred_fallthru
        _
      // Predicated region
      $region17: #{tpu_custom_call.1} parent=11 // pred_check
        %p309 = pneg %p113
      $region18: #{tpu_custom_call.1} parent=11 // pred_check_branch
        %311 = sbr.rel (%p309) target = $region20
      $region19: #{tpu_custom_call.1} parent=11 // pred_region
        _
      $region20: #{tpu_custom_call.1} parent=11 // pred_fallthru
        _
      // Predicated region
      $region21: #{tpu_custom_call.1} parent=11 // pred_check
        %p312 = pneg %p134
      $region22: #{tpu_custom_call.1} parent=11 // pred_check_branch
        %314 = sbr.rel (%p312) target = $region24
      $region23: #{tpu_custom_call.1} parent=11 // pred_region
        _
      $region24: #{tpu_custom_call.1} parent=11 // pred_fallthru
        _
      // Predicated region
      $region25: #{tpu_custom_call.1} parent=11 // pred_check
        %p315 = pneg %p155
      $region26: #{tpu_custom_call.1} parent=11 // pred_check_branch
        %317 = sbr.rel (%p315) target = $region28
      $region27: #{tpu_custom_call.1} parent=11 // pred_region
        _
      $region28: #{tpu_custom_call.1} parent=11 // pred_fallthru
        _
      // Predicated region
      $region29: #{tpu_custom_call.1} parent=11 // pred_check
        %p318 = pneg %p228
      $region30: #{tpu_custom_call.1} parent=11 // pred_check_branch
        %320 = sbr.rel (%p318) target = $region32
      $region31: #{tpu_custom_call.1} parent=11 // pred_region
        _
      $region32: #{tpu_custom_call.1} parent=11 // pred_fallthru
        _
      // Predicated region
      $region33: #{tpu_custom_call.1} parent=11 // pred_check
        %p321 = pneg %p249
      $region34: #{tpu_custom_call.1} parent=11 // pred_check_branch
        %323 = sbr.rel (%p321) target = $region36
      $region35: #{tpu_custom_call.1} parent=11 // pred_region
        _
      $region36: #{tpu_custom_call.1} parent=11 // pred_fallthru
        _
      // Predicated region
      $region37: #{tpu_custom_call.1} parent=11 // pred_check
        %p324 = pneg %p270
      $region38: #{tpu_custom_call.1} parent=11 // pred_check_branch
        %326 = sbr.rel (%p324) target = $region40
      $region39: #{tpu_custom_call.1} parent=11 // pred_region
        _
      $region40: #{tpu_custom_call.1} parent=11 // pred_fallthru
        _
    $region12: #{tpu_custom_call.1} parent=5 // pred_fallthru
      _
    %p327 = scmp.lt.s32.totalorder %s19, 2
    // Predicated region
    $region41: #{tpu_custom_call.1} parent=5 // pred_check
      %p328 = pneg %p327
    $region42: #{tpu_custom_call.1} parent=5 // pred_check_branch
      %330 = sbr.rel (%p328) target = $region44
    $region43: #{tpu_custom_call.1} parent=5 // pred_region
      // Predicated region
      $region45: #{tpu_custom_call.1} parent=43 // pred_check
        %p331 = pneg %p39
      $region46: #{tpu_custom_call.1} parent=43 // pred_check_branch
        %333 = sbr.rel (%p331) target = $region48
      $region47: #{tpu_custom_call.1} parent=43 // pred_region
        %p334 = scmp.lt.s32.totalorder %s19, 1
        %s335 = scalar_select %p334, %s19, 1
        %s336 = smul.addr %s335, 2
        %s337 = smul.addr %s336, 4
        %s338 = scalar_lea.vmem %s0, %s337
      $region48: #{tpu_custom_call.1} parent=43 // pred_fallthru
        _
      // Predicated region
      $region49: #{tpu_custom_call.1} parent=43 // pred_check
        %p339 = pneg %p65
      $region50: #{tpu_custom_call.1} parent=43 // pred_check_branch
        %341 = sbr.rel (%p339) target = $region52
      $region51: #{tpu_custom_call.1} parent=43 // pred_region
        %p342 = scmp.lt.s32.totalorder %s19, 1
        %s343 = scalar_select %p342, %s19, 1
        %s344 = smul.addr %s343, 2
        %s345 = smul.addr %s344, 4
        %s346 = scalar_lea.vmem %s1, %s345
      $region52: #{tpu_custom_call.1} parent=43 // pred_fallthru
        _
      // Predicated region
      $region53: #{tpu_custom_call.1} parent=43 // pred_check
        %p347 = pneg %p175
      $region54: #{tpu_custom_call.1} parent=43 // pred_check_branch
        %349 = sbr.rel (%p347) target = $region56
      $region55: #{tpu_custom_call.1} parent=43 // pred_region
        %s350 = smul.u32 8, %s19
        %p351 = scmp.lt.s32.totalorder %s350, 15
        %s352 = scalar_select %p351, %s350, 15
        %s353 = smul.addr %s352, 4
        %s354 = scalar_lea.vmem %s6, %s353
        %s355 = smul.u32 8, %s19
      $region56: #{tpu_custom_call.1} parent=43 // pred_fallthru
        _
      // Predicated region
      $region57: #{tpu_custom_call.1} parent=43 // pred_check
        %p356 = pneg %p201
      $region58: #{tpu_custom_call.1} parent=43 // pred_check_branch
        %358 = sbr.rel (%p356) target = $region60
      $region59: #{tpu_custom_call.1} parent=43 // pred_region
        %s359 = smul.u32 8, %s19
        %p360 = scmp.lt.s32.totalorder %s359, 15
        %s361 = scalar_select %p360, %s359, 15
        %s362 = smul.addr %s361, 4
        %s363 = scalar_lea.vmem %s7, %s362
        %s364 = smul.u32 8, %s19
      $region60: #{tpu_custom_call.1} parent=43 // pred_fallthru
        _
    $region44: #{tpu_custom_call.1} parent=5 // pred_fallthru
      _
    %p365 = scmp.le.s32.totalorder 1, %s19
    %p366 = scmp.lt.s32.totalorder %s19, 3
    %p367 = pnand %p365, %p366
    %p368 = pneg %p367
    // Predicated region
    $region61: #{tpu_custom_call.1} parent=5 // pred_check
      _
    $region62: #{tpu_custom_call.1} parent=5 // pred_check_branch
      %370 = sbr.rel (%p367) target = $region64
    $region63: #{tpu_custom_call.1} parent=5 // pred_region
      %s371 = ssub.s32 %s19, 1
      %p372 = scmp.lt.s32.totalorder %s24, 1
      %s373 = scalar_select %p372, %s24, 1
      %s374 = smul.addr %s373, 2
      %s375 = smul.addr %s374, 4
      %s376 = scalar_lea.vmem %s0, %s375
      %p377 = pneg %p45
      %p378 = pneg %p42
      %p379 = scmp.lt.s32.totalorder %s24, 1
      %s380 = scalar_select %p379, %s24, 1
      %s381 = smul.addr %s380, 2
      %s382 = smul.addr %s381, 4
      %s383 = scalar_lea.vmem %s1, %s382
      %p384 = pneg %p71
      %p385 = pneg %p68
      %p386 = pneg %p92
      %p387 = pneg %p89
      %p388 = pneg %p113
      %p389 = pneg %p110
      %p390 = pneg %p134
      %p391 = pneg %p131
      %p392 = pneg %p155
      %p393 = pneg %p152
      %s394 = smul.u32 8, %s24
      %p395 = scmp.lt.s32.totalorder %s394, 15
      %s396 = scalar_select %p395, %s394, 15
      %s397 = smul.addr %s396, 4
      %s398 = scalar_lea.vmem %s6, %s397
      %p399 = pneg %p181
      %p400 = pneg %p178
      %s401 = smul.u32 8, %s24
      %p402 = scmp.lt.s32.totalorder %s401, 15
      %s403 = scalar_select %p402, %s401, 15
      %s404 = smul.addr %s403, 4
      %s405 = scalar_lea.vmem %s7, %s404
      %p406 = pneg %p207
      %p407 = pneg %p204
      %p408 = pneg %p228
      %p409 = pneg %p225
      %p410 = pneg %p249
      %p411 = pneg %p246
      %p412 = pneg %p270
      %p413 = pneg %p267
      %p414 = pneg %p291
      %p415 = pneg %p288
      %p416 = scmp.lt.s32.totalorder %s24, 1
      %s417 = scalar_select %p416, %s24, 1
      %s418 = smul.addr %s417, 2
      %s419 = smul.addr %s418, 4
      %s420 = scalar_lea.vmem %s0, %s419
      %p421 = scmp.lt.s32.totalorder %s24, 1
      %s422 = scalar_select %p421, %s24, 1
      %s423 = smul.addr %s422, 2
      %s424 = smul.addr %s423, 4
      %s425 = scalar_lea.vmem %s1, %s424
      %s426 = smul.u32 8, %s24
      %p427 = scmp.lt.s32.totalorder %s426, 15
      %s428 = scalar_select %p427, %s426, 15
      %s429 = smul.addr %s428, 4
      %s430 = scalar_lea.vmem %s6, %s429
      %s431 = smul.u32 8, %s24
      %s432 = smul.u32 8, %s24
      %p433 = scmp.lt.s32.totalorder %s432, 15
      %s434 = scalar_select %p433, %s432, 15
      %s435 = smul.addr %s434, 4
      %s436 = scalar_lea.vmem %s7, %s435
      %s437 = smul.u32 8, %s24
      %p439 = scmp.eq.s32.totalorder %s24, 0
      // Predicated region
      $region65: #{tpu_custom_call.1} parent=63 // pred_check
        %p440 = pneg %p439
      $region66: #{tpu_custom_call.1} parent=63 // pred_check_branch
        %442 = sbr.rel (%p440) target = $region68
      $region67: #{tpu_custom_call.1} parent=63 // pred_region
        %vm443 = vcmask 517120
        %444 = vst.msk [vmem:[#allocation4] sm:$0x3] %vm443, 0.0
      $region68: #{tpu_custom_call.1} parent=63 // pred_fallthru
        _
      %v445 = vld [vmem:[%s420] sm:$0xf]
      %v446 = vld [vmem:[%s420 + $0x4] sm:$0xf]
      %v447 = vld [vmem:[%s2] sm:$0xf]
      %v448 = vld [vmem:[%s2 + $0x4] sm:$0xf]
      %v449 = vld [vmem:[%s4] sm:$0x1]
      %v451 = vperm.slane %v449, 0
      %v455 = vunpack.c.l.b16 %v445
      %v456 = vunpack.c.l.b16 %v446
      %v457 = vpack.c.b16 %v456, %v455
      %v460 = vunpack.c.l.b16 %v447
      %v461 = vunpack.c.l.b16 %v448
      %v462 = vpack.c.b16 %v461, %v460
      %vm464 = vcmask 130048
      %v466 = vsel %vm464, %v457, 0
      %468 = vmatpush.bf16.msra.mxu0 0
      %469 = vmatpush.bf16.msra.mxu0 0
      %470 = vmatpush.bf16.msra.mxu0 0
      %471 = vmatpush.bf16.msra.mxu0 0
      %472 = vmatpush.bf16.msra.mxu0 0
      %473 = vmatpush.bf16.msra.mxu0 0
      %474 = vmatpush.bf16.msra.mxu0 0
      %475 = vmatpush.bf16.msra.mxu0 %v462
      %476 = vmatmul.bf16.gmra.mxu0 %v466
      %v477 = vpop.f32.mrf.mxu0
      %v478 = vadd.f32 %v451, %v477
      %v479 = vpop.f32.mrf.mxu0
      %v480 = vadd.f32 %v451, %v479
      %481 = vdwg.mxu0
      %v482 = vmax.f32 %v478, 0.0
      %v483 = vmax.f32 %v480, 0.0
      %vm484 = vcmask 261120
      %485 = vst.msk [vmem:[#allocation2] sm:$0xff] %vm484, %v482
      %486 = vst.msk [vmem:[#allocation2 + $0x8] sm:$0xff] %vm484, %v483
      %v487 = vld [vmem:[#allocation2] ss:$4 sm:$0xf]
      %s488 = scalar_lea.vmem [#allocation2], 1
      %v489 = vld [vmem:[%s488] ss:$4 sm:$0xf]
      %v490 = vmax.f32 %v487, %v489
      %s491 = scalar_lea.vmem [#allocation2], 2
      %v492 = vld [vmem:[%s491] ss:$4 sm:$0xf]
      %v493 = vmax.f32 %v490, %v492
      %s494 = scalar_lea.vmem [#allocation2], 3
      %v495 = vld [vmem:[%s494] ss:$4 sm:$0xf]
      %v496 = vmax.f32 %v493, %v495
      %vm497 = vcmask 257024
      %498 = vst.msk [vmem:[#allocation3] sm:$0xf] %vm497, %v496
      %v499 = vld [vmem:[#allocation3] ss:$2 sm:$0x3]
      %s500 = scalar_lea.vmem [#allocation3], 1
      %v501 = vld [vmem:[%s500] ss:$2 sm:$0x3]
      %503 = vrot.lane.b32.xlu0 %v501, 32
      %v504 = vpop.permute.xlu0 %503
      %v506 = vsel %vm484, %v499, %v504
      %v507 = vld [vmem:[#allocation4] sm:$0x3]
      %v508 = vpack.c.bf16 %v506, %v506
      %v509 = vld [vmem:[%s430] sm:$0xf]
      %v510 = vld [vmem:[%s430 + $0x4] sm:$0xf]
      %v511 = vld [vmem:[%s430 + $0x8] sm:$0xf]
      %v512 = vld [vmem:[%s430 + $0xc] sm:$0xf]
      %v513 = vld [vmem:[%s430 + $0x10] sm:$0xf]
      %v514 = vld [vmem:[%s430 + $0x14] sm:$0xf]
      %v515 = vld [vmem:[%s430 + $0x18] sm:$0xf]
      %v516 = vld [vmem:[%s430 + $0x1c] sm:$0xf]
      %v525 = vunpack.c.l.b16 %v509
      %v526 = vunpack.c.l.b16 %v510
      %v527 = vunpack.c.l.b16 %v511
      %v528 = vunpack.c.l.b16 %v512
      %v529 = vunpack.c.l.b16 %v513
      %v530 = vunpack.c.l.b16 %v514
      %v531 = vunpack.c.l.b16 %v515
      %v532 = vunpack.c.l.b16 %v516
      %v533 = vpack.c.b16 %v526, %v525
      %v534 = vpack.c.b16 %v528, %v527
      %v535 = vpack.c.b16 %v530, %v529
      %v536 = vpack.c.b16 %v532, %v531
      %vm541 = vcmask 523264
      %v543 = vsel %vm541, %v508, 0
      %545 = vmatpush.bf16.msra.mxu0 0
      %546 = vmatpush.bf16.msra.mxu0 0
      %547 = vmatpush.bf16.msra.mxu0 0
      %548 = vmatpush.bf16.msra.mxu0 0
      %549 = vmatpush.bf16.msra.mxu0 %v536
      %550 = vmatpush.bf16.msra.mxu0 %v535
      %551 = vmatpush.bf16.msra.mxu0 %v534
      %552 = vmatpush.bf16.msra.mxu0 %v533
      %553 = vmatmul.bf16.gmra.mxu0 %v543
      %v554 = vpop.f32.mrf.mxu0
      %v555 = vadd.f32 0.0, %v554
      %v556 = vpop.f32.mrf.mxu0
      %557 = vdwg.mxu0
      %v558 = vadd.f32 %v507, %v555
      %vm559 = vcmask 517120
      %560 = vst.msk [vmem:[#allocation4] sm:$0x3] %vm559, %v558
      %v561 = vld [vmem:[%s425] sm:$0xf]
      %v562 = vld [vmem:[%s425 + $0x4] sm:$0xf]
      %v563 = vld [vmem:[%s3] sm:$0xf]
      %v564 = vld [vmem:[%s3 + $0x4] sm:$0xf]
      %v565 = vld [vmem:[%s5] sm:$0x1]
      %v567 = vperm.slane %v565, 0
      %v571 = vunpack.c.l.b16 %v561
      %v572 = vunpack.c.l.b16 %v562
      %v573 = vpack.c.b16 %v572, %v571
      %v576 = vunpack.c.l.b16 %v563
      %v577 = vunpack.c.l.b16 %v564
      %v578 = vpack.c.b16 %v577, %v576
      %v581 = vsel %vm464, %v573, 0
      %583 = vmatpush.bf16.msra.mxu0 0
      %584 = vmatpush.bf16.msra.mxu0 0
      %585 = vmatpush.bf16.msra.mxu0 0
      %586 = vmatpush.bf16.msra.mxu0 0
      %587 = vmatpush.bf16.msra.mxu0 0
      %588 = vmatpush.bf16.msra.mxu0 0
      %589 = vmatpush.bf16.msra.mxu0 0
      %590 = vmatpush.bf16.msra.mxu0 %v578
      %591 = vmatmul.bf16.gmra.mxu0 %v581
      %v592 = vpop.f32.mrf.mxu0
      %v593 = vadd.f32 %v567, %v592
      %v594 = vpop.f32.mrf.mxu0
      %v595 = vadd.f32 %v567, %v594
      %596 = vdwg.mxu0
      %v597 = vmax.f32 %v593, 0.0
      %v598 = vmax.f32 %v595, 0.0
      %599 = vst.msk [vmem:[#allocation2] sm:$0xff] %vm484, %v597
      %600 = vst.msk [vmem:[#allocation2 + $0x8] sm:$0xff] %vm484, %v598
      %v601 = vld [vmem:[#allocation2] ss:$4 sm:$0xf]
      %v602 = vld [vmem:[%s488] ss:$4 sm:$0xf]
      %v603 = vmax.f32 %v601, %v602
      %v604 = vld [vmem:[%s491] ss:$4 sm:$0xf]
      %v605 = vmax.f32 %v603, %v604
      %v606 = vld [vmem:[%s494] ss:$4 sm:$0xf]
      %v607 = vmax.f32 %v605, %v606
      %608 = vst.msk [vmem:[#allocation3] sm:$0xf] %vm497, %v607
      %v609 = vld [vmem:[#allocation3] ss:$2 sm:$0x3]
      %v610 = vld [vmem:[%s500] ss:$2 sm:$0x3]
      %612 = vrot.lane.b32.xlu0 %v610, 32
      %v613 = vpop.permute.xlu0 %612
      %v615 = vsel %vm484, %v609, %v613
      %v616 = vld [vmem:[#allocation4] sm:$0x3]
      %v617 = vpack.c.bf16 %v615, %v615
      %v618 = vld [vmem:[%s436] sm:$0xf]
      %v619 = vld [vmem:[%s436 + $0x4] sm:$0xf]
      %v620 = vld [vmem:[%s436 + $0x8] sm:$0xf]
      %v621 = vld [vmem:[%s436 + $0xc] sm:$0xf]
      %v622 = vld [vmem:[%s436 + $0x10] sm:$0xf]
      %v623 = vld [vmem:[%s436 + $0x14] sm:$0xf]
      %v624 = vld [vmem:[%s436 + $0x18] sm:$0xf]
      %v625 = vld [vmem:[%s436 + $0x1c] sm:$0xf]
      %v634 = vunpack.c.l.b16 %v618
      %v635 = vunpack.c.l.b16 %v619
      %v636 = vunpack.c.l.b16 %v620
      %v637 = vunpack.c.l.b16 %v621
      %v638 = vunpack.c.l.b16 %v622
      %v639 = vunpack.c.l.b16 %v623
      %v640 = vunpack.c.l.b16 %v624
      %v641 = vunpack.c.l.b16 %v625
      %v642 = vpack.c.b16 %v635, %v634
      %v643 = vpack.c.b16 %v637, %v636
      %v644 = vpack.c.b16 %v639, %v638
      %v645 = vpack.c.b16 %v641, %v640
      %v651 = vsel %vm541, %v617, 0
      %653 = vmatpush.bf16.msra.mxu0 0
      %654 = vmatpush.bf16.msra.mxu0 0
      %655 = vmatpush.bf16.msra.mxu0 0
      %656 = vmatpush.bf16.msra.mxu0 0
      %657 = vmatpush.bf16.msra.mxu0 %v645
      %658 = vmatpush.bf16.msra.mxu0 %v644
      %659 = vmatpush.bf16.msra.mxu0 %v643
      %660 = vmatpush.bf16.msra.mxu0 %v642
      %661 = vmatmul.bf16.gmra.mxu0 %v651
      %v662 = vpop.f32.mrf.mxu0
      %v663 = vadd.f32 0.0, %v662
      %v664 = vpop.f32.mrf.mxu0
      %665 = vdwg.mxu0
      %v666 = vadd.f32 %v616, %v663
      %667 = vst.msk [vmem:[#allocation4] sm:$0x3] %vm559, %v666
      %p668 = scmp.eq.s32.totalorder %s24, 1
      // Predicated region
      $region69: #{tpu_custom_call.1} parent=63 // pred_check
        %p669 = pneg %p668
      $region70: #{tpu_custom_call.1} parent=63 // pred_check_branch
        %671 = sbr.rel (%p669) target = $region72
      $region71: #{tpu_custom_call.1} parent=63 // pred_region
        %v672 = vld [vmem:[#allocation4] sm:$0x3]
        %v673 = vld [vmem:[%s8] sm:$0x1]
        %v675 = vperm.slane %v673, 0
        %v677 = vadd.f32 %v672, %v675
        %v678 = vmax.f32 %v677, 0.0
        %v679 = vld [vmem:[%s9] sm:$0x1]
        %v681 = vperm.slane %v679, 0
        %v683 = vmul.f32 %v678, %v681
        %v684 = vsel %vm559, %v683, 0.0
        %685 = vadd.xlane.f32.xlu0 %v684
        %v686 = vpop.xlane.xlu0 %685
        %v687 = vld [vmem:[#allocation5] sm:$0x1]
        %v689 = vperm.slane %v687, 0
        %v691 = vadd.f32 %v686, %v689
        %vm692 = vcmask 1024
        %693 = vst.msk [vmem:[%s11] sm:$0x3] %vm692, %v691
      $region72: #{tpu_custom_call.1} parent=63 // pred_fallthru
        _
      // Predicated region
      $region73: #{tpu_custom_call.1} parent=63 // pred_check
        %p694 = pneg %p288
      $region74: #{tpu_custom_call.1} parent=63 // pred_check_branch
        %696 = sbr.rel (%p694) target = $region76
      $region75: #{tpu_custom_call.1} parent=63 // pred_region
        _
      $region76: #{tpu_custom_call.1} parent=63 // pred_fallthru
        _
      // Predicated region
      $region77: #{tpu_custom_call.1} parent=63 // pred_check
        %p697 = pneg %p288
      $region78: #{tpu_custom_call.1} parent=63 // pred_check_branch
        %699 = sbr.rel (%p697) target = $region80
      $region79: #{tpu_custom_call.1} parent=63 // pred_region
        _
      $region80: #{tpu_custom_call.1} parent=63 // pred_fallthru
        _
    $region64: #{tpu_custom_call.1} parent=5 // pred_fallthru
      _
    %p700 = scmp.le.s32.totalorder 2, %s19
    // Predicated region
    $region81: #{tpu_custom_call.1} parent=5 // pred_check
      %p701 = pneg %p700
    $region82: #{tpu_custom_call.1} parent=5 // pred_check_branch
      %703 = sbr.rel (%p701) target = $region84
    $region83: #{tpu_custom_call.1} parent=5 // pred_region
      %s704 = ssub.s32 %s19, 2
    $region84: #{tpu_custom_call.1} parent=5 // pred_fallthru
      _
  $region6: #{tpu_custom_call.1} parent=0 // loop_footer
    %s23 = sadd.s32 1, %s19
  $region7: #{tpu_custom_call.1} parent=0 // loop_footer_branch
    %18 = sbr.rel target = $region3
  $region8: #{tpu_custom_call.1} parent=0 // loop_exit
    _

</llo_original>
